<compile_context>
chip_gen: v6e
topology: v6e:2x2x1
jax: 0.10.0
libtpu: 0.0.40
codegen_flags: <defaults>
</compile_context>

<pallas_src>
import functools

import jax
import jax.numpy as jnp
from jax.experimental import pallas as pl
from jax.experimental.pallas import tpu as pltpu


# ---------------------------------------------------------------------------
# Helpers
# ---------------------------------------------------------------------------

def _round_up(x, m):
    return ((x + m - 1) // m) * m


def _sublane_multiple(itemsize):
    # (8, 128) vreg tiling; sub-32-bit dtypes pack along sublanes.
    return max(8, 8 * (4 // max(int(itemsize), 1)))


def _tpu_vmem_bytes():
    """Best-effort VMEM capacity query; conservative (64 MiB) fallback."""
    try:
        info = pltpu.get_tpu_info()
        for name in ("vmem_capacity_bytes", "vmem_size_bytes", "vmem_bytes"):
            val = getattr(info, name, None)
            if val:
                return int(val)
    except Exception:
        pass
    return 64 << 20


def _choose_tb(batch, elem_bytes, target_bytes, min_steps):
    """Largest divisor-of-batch tile with x tile <= target_bytes, preferring
    >= min_steps grid steps (pipelining; >= 2 steps per core on megacore)."""
    tb = max(1, min(batch, target_bytes // max(elem_bytes, 1)))
    while batch % tb:
        tb -= 1
    while tb > 1 and (batch // tb) < min_steps:
        tb -= 1
        while batch % tb:
            tb -= 1
    return tb


def _choose_channel_tile(channels, tc_max):
    """Largest divisor of `channels` <= tc_max that is sublane-aligned
    (multiple of 8); falls back to the full channel count (always legal)."""
    for d in range(min(channels, max(int(tc_max), 1)), 0, -1):
        if channels % d == 0 and d % 8 == 0:
            return d
    return channels


# ---------------------------------------------------------------------------
# Fused kernel: TB batch elements per grid step (pool -> excite -> scale)
# ---------------------------------------------------------------------------

def _se_fused_kernel(x_ref, w1t_ref, w2t_ref, o_ref, *, hw, mxu_pool):
    # x_ref / o_ref : (TB, C, HW)
    # w1t_ref       : (C, Cr)   first nn.Linear weight, pre-transposed, I/O dtype
    # w2t_ref       : (Cr, C)   second nn.Linear weight, pre-transposed, I/O dtype
    tb, c, _ = x_ref.shape

    # Squeeze: global average pool, accumulated in float32.
    if mxu_pool:
        # Sub-32-bit inputs: sum over HW on the MXU (ones-vector matmul with
        # f32 accumulation) -- no full-tile f32 cast, no cross-lane XLU reduce.
        ones = jnp.ones((hw, 1), dtype=x_ref.dtype)
        ysum = jnp.dot(x_ref[...].reshape(tb * c, hw), ones,
                       preferred_element_type=jnp.float32).reshape(tb, c)
    else:
        # 32-bit inputs: exact f32 lane reduce (the cast is a no-op).
        ysum = jnp.sum(x_ref[...].astype(jnp.float32), axis=-1)
    y = ysum * (1.0 / hw)                                             # (TB, C) f32

    # Excitation: Linear -> ReLU -> Linear -> Sigmoid, batched over TB.
    # Matmuls run in the I/O dtype with f32 accumulation on the MXU.
    h = jnp.maximum(
        jnp.dot(y.astype(w1t_ref.dtype), w1t_ref[...],
                preferred_element_type=jnp.float32), 0.0)             # (TB, Cr)
    s = jax.nn.sigmoid(
        jnp.dot(h.astype(w2t_ref.dtype), w2t_ref[...],
                preferred_element_type=jnp.float32))                  # (TB, C)

    # Scale: second VMEM read of x (avoids a multi-MiB live value across the
    # excitation); multiply/store in the I/O dtype.
    gate = s.astype(o_ref.dtype)[:, :, None]                          # (TB, C, 1)
    o_ref[...] = (x_ref[...] * gate).astype(o_ref.dtype)


# ---------------------------------------------------------------------------
# Fallback (huge per-batch element): channel-split two-pass path
# ---------------------------------------------------------------------------

def _se_gate_kernel(x_ref, w1t_ref, w2t_ref, gate_ref, h_acc, *, hw, mxu_pool):
    # Pass 1: pool each channel tile and accumulate the first excitation
    # matmul across channel tiles; finalize ReLU/Linear/Sigmoid on the last.
    # x_ref   : (1, TC, HW)
    # w1t_ref : (TC, Cr)   rows of W1^T for this channel tile
    # w2t_ref : (Cr, C)
    # gate_ref: (1, C, 1)  resident across the channel ("arbitrary") axis
    # h_acc   : (1, Cr) f32 scratch
    c_idx = pl.program_id(1)

    @pl.when(c_idx == 0)
    def _():
        h_acc[...] = jnp.zeros_like(h_acc)

    _, tc, _ = x_ref.shape
    if mxu_pool:
        ones = jnp.ones((hw, 1), dtype=x_ref.dtype)
        part = jnp.dot(x_ref[...].reshape(tc, hw), ones,
                       preferred_element_type=jnp.float32).reshape(1, tc)
    else:
        part = jnp.sum(x_ref[...].astype(jnp.float32), axis=-1)      # (1, TC)
    y_part = (part * (1.0 / hw)).astype(w1t_ref.dtype)               # (1, TC)
    h_acc[...] += jnp.dot(y_part, w1t_ref[...],
                          preferred_element_type=jnp.float32)        # (1, Cr)

    @pl.when(c_idx == pl.num_programs(1) - 1)
    def _():
        h = jnp.maximum(h_acc[...], 0.0).astype(w2t_ref.dtype)       # (1, Cr)
        s = jax.nn.sigmoid(
            jnp.dot(h, w2t_ref[...], preferred_element_type=jnp.float32))
        gate_ref[...] = s.astype(gate_ref.dtype).reshape(gate_ref.shape)


def _se_scale_kernel(x_ref, gate_ref, o_ref):
    # Pass 2: o = x * gate, per (batch, channel-tile) block.
    # x_ref / o_ref : (1, TC, HW); gate_ref : (1, TC, 1)
    o_ref[...] = (x_ref[...] * gate_ref[...]).astype(o_ref.dtype)


# ---------------------------------------------------------------------------
# Wrapper
# ---------------------------------------------------------------------------

def se_layer(x, w1, w2, *, max_tile_bytes=None):
    """SELayer forward.

    x : (B, C, H, W)
    w1: (C // reduction, C)  -- first nn.Linear weight (out, in), no bias
    w2: (C, C // reduction)  -- second nn.Linear weight (out, in), no bias
    """
    B, C, H, W = x.shape
    HW = H * W
    Cr = w1.shape[0]
    dtype = x.dtype
    itemsize = dtype.itemsize

    x_flat = x.reshape(B, C, HW)
    # Pre-transpose the small Linear weights once; keep them in the I/O dtype
    # (the kernel matmuls run in that dtype with f32 MXU accumulation).
    w1t = w1.T.astype(dtype)                               # (C, Cr)
    w2t = w2.T.astype(dtype)                               # (Cr, C)

    # Padded (sublane x 128-lane) footprints, not raw element counts.
    sub = _sublane_multiple(itemsize)
    elem_bytes = _round_up(C, sub) * _round_up(HW, 128) * itemsize
    w_bytes = (_round_up(C, sub) * _round_up(Cr, 128)
               + _round_up(Cr, sub) * _round_up(C, 128)) * itemsize

    # Generation-aware budgets: 128 MiB VMEM parts (v5e/v6e) vs 64 MiB (v7x).
    if _tpu_vmem_bytes() >= (128 << 20):
        vmem_limit, tile_target, min_steps = 100 << 20, 16 << 20, 2
    else:
        vmem_limit, tile_target, min_steps = 48 << 20, 8 << 20, 4
    # 2x-in + 2x-out tile buffers + double-buffered weights must fit.
    tile_target = min(tile_target,
                      max(512 << 10, (vmem_limit - 2 * w_bytes - (4 << 20)) // 4))
    if max_tile_bytes is not None:
        tile_target = min(tile_target, int(max_tile_bytes))

    mxu_pool = itemsize < 4   # bf16 etc.: pool on the MXU with f32 accumulation

    cost = pl.CostEstimate(
        flops=int(2 * B * C * HW + 4 * B * C * Cr),
        transcendentals=int(B * C),
        bytes_accessed=int(2 * B * C * HW * itemsize + 2 * C * Cr * itemsize),
    )

    if elem_bytes <= tile_target:
        # ---- Fused single-pass kernel: TB batch elements per grid step ----
        tb = _choose_tb(B, elem_bytes, tile_target, min_steps)
        kernel = functools.partial(_se_fused_kernel, hw=HW, mxu_pool=mxu_pool)
        out_flat = pl.pallas_call(
            kernel,
            out_shape=jax.ShapeDtypeStruct((B, C, HW), dtype),
            grid_spec=pltpu.PrefetchScalarGridSpec(
                num_scalar_prefetch=0,
                grid=(B // tb,),
                in_specs=[
                    pl.BlockSpec((tb, C, HW), lambda b: (b, 0, 0)),
                    pl.BlockSpec((C, Cr), lambda b: (0, 0)),
                    pl.BlockSpec((Cr, C), lambda b: (0, 0)),
                ],
                out_specs=pl.BlockSpec((tb, C, HW), lambda b: (b, 0, 0)),
            ),
            compiler_params=pltpu.CompilerParams(
                dimension_semantics=("parallel",),
                vmem_limit_bytes=vmem_limit,
            ),
            cost_estimate=cost,
        )(x_flat, w1t, w2t)
        return out_flat.reshape(B, C, H, W)

    # ---- Fallback: a single batch element exceeds the tile budget. --------
    # Split the channel axis over a second ("arbitrary") grid axis: pass 1
    # computes the per-batch gate, pass 2 scales each channel tile.
    tc = _choose_channel_tile(
        C, tile_target // max(_round_up(HW, 128) * itemsize, 1))
    n_c = C // tc

    gate_kernel = functools.partial(_se_gate_kernel, hw=HW, mxu_pool=mxu_pool)
    gates = pl.pallas_call(
        gate_kernel,
        out_shape=jax.ShapeDtypeStruct((B, C, 1), dtype),
        grid_spec=pltpu.PrefetchScalarGridSpec(
            num_scalar_prefetch=0,
            grid=(B, n_c),
            in_specs=[
                pl.BlockSpec((1, tc, HW), lambda b, c: (b, c, 0)),
                pl.BlockSpec((tc, Cr), lambda b, c: (c, 0)),
                pl.BlockSpec((Cr, C), lambda b, c: (0, 0)),
            ],
            out_specs=pl.BlockSpec((1, C, 1), lambda b, c: (b, 0, 0)),
            scratch_shapes=[pltpu.VMEM((1, Cr), jnp.float32)],
        ),
        compiler_params=pltpu.CompilerParams(
            dimension_semantics=("parallel", "arbitrary"),
            vmem_limit_bytes=vmem_limit,
        ),
    )(x_flat, w1t, w2t)

    out_flat = pl.pallas_call(
        _se_scale_kernel,
        out_shape=jax.ShapeDtypeStruct((B, C, HW), dtype),
        grid_spec=pltpu.PrefetchScalarGridSpec(
            num_scalar_prefetch=0,
            grid=(B, n_c),
            in_specs=[
                pl.BlockSpec((1, tc, HW), lambda b, c: (b, c, 0)),
                pl.BlockSpec((1, tc, 1), lambda b, c: (b, c, 0)),
            ],
            out_specs=pl.BlockSpec((1, tc, HW), lambda b, c: (b, c, 0)),
        ),
        compiler_params=pltpu.CompilerParams(
            dimension_semantics=("parallel", "parallel"),
            vmem_limit_bytes=vmem_limit,
        ),
        cost_estimate=cost,
    )(x_flat, gates)
    return out_flat.reshape(B, C, H, W)


def se_layer_ref(x, w1, w2):
    """Pure-JAX reference mirroring the PyTorch forward."""
    y = jnp.mean(x.astype(jnp.float32), axis=(2, 3))               # (B, C)
    y = jnp.maximum(y @ w1.T.astype(jnp.float32), 0.0)             # (B, C//r)
    y = jax.nn.sigmoid(y @ w2.T.astype(jnp.float32))               # (B, C)
    return x * y.astype(x.dtype)[:, :, None, None]


if __name__ == "__main__":
    key = jax.random.PRNGKey(0)

    # (B, C, H, W, reduction, dtype, max_tile_bytes, tol)
    configs = [
        (2, 128, 7, 7, 16, jnp.float32, None, 1e-5),       # HW not lane-aligned (masked stores)
        (4, 32, 16, 16, 16, jnp.float32, None, 1e-5),      # HW lane-aligned
        (2, 128, 7, 7, 16, jnp.bfloat16, None, 3e-2),      # bf16 I/O -> MXU pooling path
        (2, 64, 16, 16, 16, jnp.float32, 32 * 1024, 1e-5), # forces the channel-split fallback
    ]
    for (B, C, H, W, reduction, dtype, mtb, tol) in configs:
        Cr = max(1, C // reduction)
        key, kx, k1, k2 = jax.random.split(key, 4)
        x = jax.random.normal(kx, (B, C, H, W), dtype=jnp.float32).astype(dtype)
        # nn.Linear weights: shape (out, in), no bias.
        w1 = (jax.random.normal(k1, (Cr, C), dtype=jnp.float32)
              * (1.0 / jnp.sqrt(C))).astype(dtype)
        w2 = (jax.random.normal(k2, (C, Cr), dtype=jnp.float32)
              * (1.0 / jnp.sqrt(Cr))).astype(dtype)

        out = jax.block_until_ready(se_layer(x, w1, w2, max_tile_bytes=mtb))
        ref = se_layer_ref(x, w1, w2)
        assert out.shape == (B, C, H, W)
        assert jnp.allclose(out.astype(jnp.float32), ref.astype(jnp.float32),
                            atol=tol, rtol=tol), \
            f"mismatch vs reference for {(B, C, H, W)} dtype={dtype}"

    print("KERNEL_OK")
</pallas_src>

<mosaic_0001>
module attributes {stable_mosaic.version = 11 : i64} {
  func.func @_se_fused_kernel(%arg0: i32, %arg1: memref<1x128x49xf32, #tpu.memory_space<vmem>>, %arg2: memref<128x8xf32, #tpu.memory_space<vmem>>, %arg3: memref<8x128xf32, #tpu.memory_space<vmem>>, %arg4: memref<1x128x49xf32, #tpu.memory_space<vmem>>) attributes {dimension_semantics = [#tpu.dimension_semantics<parallel>], iteration_bounds = array<i64: 2>, scalar_prefetch = 0 : i64, scratch_operands = 0 : i64, tpu.core_type = #tpu.core_type<tc>, window_params = [{transform_indices = @transform_0, window_bounds = array<i64: 1, 128, 49>}, {pipeline_mode = #tpu.pipeline_mode<synchronous>, transform_indices = @transform_1, window_bounds = array<i64: 128, 8>}, {pipeline_mode = #tpu.pipeline_mode<synchronous>, transform_indices = @transform_2, window_bounds = array<i64: 8, 128>}, {transform_indices = @transform_3, window_bounds = array<i64: 1, 128, 49>}]} {
    %c0 = arith.constant 0 : index
    %c0_0 = arith.constant 0 : index
    %c0_1 = arith.constant 0 : index
    %0 = vector.load %arg1[%c0, %c0_0, %c0_1] : memref<1x128x49xf32, #tpu.memory_space<vmem>>, vector<1x128x49xf32>
    %cst = arith.constant dense<0.000000e+00> : vector<1x128xf32>
    %1 = vector.multi_reduction <add>, %0, %cst [2] : vector<1x128x49xf32> to vector<1x128xf32>
    %cst_2 = arith.constant 0.0204081628 : f32
    %2 = vector.broadcast %cst_2 : f32 to vector<1x128xf32>
    %3 = arith.mulf %1, %2 : vector<1x128xf32>
    %c0_3 = arith.constant 0 : index
    %c0_4 = arith.constant 0 : index
    %4 = vector.load %arg2[%c0_3, %c0_4] : memref<128x8xf32, #tpu.memory_space<vmem>>, vector<128x8xf32>
    %cst_5 = arith.constant dense<0.000000e+00> : vector<1x8xf32>
    %5 = tpu.matmul %3, %4, %cst_5 {dimension_numbers = #tpu.dot_dimension_numbers<[1], [0], [0], [1], [0, 0, 1, 1], [], []>} : vector<1x128xf32>, vector<128x8xf32>, vector<1x8xf32> -> vector<1x8xf32>
    %cst_6 = arith.constant 0.000000e+00 : f32
    %6 = vector.broadcast %cst_6 : f32 to vector<1x8xf32>
    %7 = arith.maximumf %5, %6 : vector<1x8xf32>
    %c0_7 = arith.constant 0 : index
    %c0_8 = arith.constant 0 : index
    %8 = vector.load %arg3[%c0_7, %c0_8] : memref<8x128xf32, #tpu.memory_space<vmem>>, vector<8x128xf32>
    %cst_9 = arith.constant dense<0.000000e+00> : vector<1x128xf32>
    %9 = tpu.matmul %7, %8, %cst_9 {dimension_numbers = #tpu.dot_dimension_numbers<[1], [0], [0], [1], [0, 0, 1, 1], [], []>} : vector<1x8xf32>, vector<8x128xf32>, vector<1x128xf32> -> vector<1x128xf32>
    %10 = arith.negf %9 : vector<1x128xf32>
    %11 = math.exp %10 : vector<1x128xf32>
    %cst_10 = arith.constant 1.000000e+00 : f32
    %12 = vector.broadcast %cst_10 : f32 to vector<1x128xf32>
    %13 = arith.addf %12, %11 : vector<1x128xf32>
    %14 = arith.divf %12, %13 : vector<1x128xf32>
    %15 = vector.shape_cast %14 : vector<1x128xf32> to vector<1x128x1xf32>
    %c0_11 = arith.constant 0 : index
    %c0_12 = arith.constant 0 : index
    %c0_13 = arith.constant 0 : index
    %16 = vector.load %arg1[%c0_11, %c0_12, %c0_13] : memref<1x128x49xf32, #tpu.memory_space<vmem>>, vector<1x128x49xf32>
    %17 = vector.broadcast %15 : vector<1x128x1xf32> to vector<1x128x49xf32>
    %18 = arith.mulf %16, %17 : vector<1x128x49xf32>
    %c0_14 = arith.constant 0 : index
    %c0_15 = arith.constant 0 : index
    %c0_16 = arith.constant 0 : index
    %19 = vector.load %arg4[%c0_14, %c0_15, %c0_16] : memref<1x128x49xf32, #tpu.memory_space<vmem>>, vector<1x128x49xf32>
    tpu.vector_store %arg4[%c0_14, %c0_15, %c0_16], %18 {strides = array<i32>} : memref<1x128x49xf32, #tpu.memory_space<vmem>>, vector<1x128x49xf32>,
    return
  }
  func.func @transform_0(%arg0: i32) -> (i32, i32, i32) {
    %c0_i32 = arith.constant 0 : i32
    %c0_i32_0 = arith.constant 0 : i32
    %c0_i32_1 = arith.constant 0 : i32
    return %arg0, %c0_i32, %c0_i32_0 : i32, i32, i32
  }
  func.func @transform_1(%arg0: i32) -> (i32, i32) {
    %c0_i32 = arith.constant 0 : i32
    %c0_i32_0 = arith.constant 0 : i32
    %c0_i32_1 = arith.constant 0 : i32
    return %c0_i32, %c0_i32_0 : i32, i32
  }
  func.func @transform_2(%arg0: i32) -> (i32, i32) {
    %c0_i32 = arith.constant 0 : i32
    %c0_i32_0 = arith.constant 0 : i32
    %c0_i32_1 = arith.constant 0 : i32
    return %c0_i32, %c0_i32_0 : i32, i32
  }
  func.func @transform_3(%arg0: i32) -> (i32, i32, i32) {
    %c0_i32 = arith.constant 0 : i32
    %c0_i32_0 = arith.constant 0 : i32
    %c0_i32_1 = arith.constant 0 : i32
    return %arg0, %c0_i32, %c0_i32_0 : i32, i32, i32
  }
}

</mosaic_0001>

<llo_original>
// kernel: tpu_custom_call.1
$region0: #{tpu_custom_call.1}
  #allocation0 [shape = 'u32[]', space=smem, size = 0x4, offset = 0x4, fixed_abs, tag = 'smem constant byte address 0x4 - core index']
  #allocation1 [shape = 'u32[144,128]{1,0:T(1,128)}', space=vmem, size = 0x12000, scoped, tag = 'internal scratch']
  %s0 = inlined_call_operand.vmem [shape: f32[2,128,49], index: 0, kind: input, shape index: {}]
  %s1 = inlined_call_operand.vmem [shape: f32[128,8], index: 1, kind: input, shape index: {}]
  %s2 = inlined_call_operand.vmem [shape: f32[8,128], index: 2, kind: input, shape index: {}]
  %s3 = inlined_call_operand.vmem [shape: f32[2,128,49], index: 3, kind: output, shape index: {}]
  %s4 = sld [smem:[#allocation0]]
  $region45: #{tpu_custom_call.1} parent=0
    _
  %s6 = ssub.s32 1, %s4
  %s7 = scalar_select 0, %s6, %s4
  loop: start=0, step=1, limit=4
  $region2: #{tpu_custom_call.1} parent=0 // loop_pre_header
    _
  $region3: #{tpu_custom_call.1} parent=0 // loop_header
    %s9 = sphi 0, %s13
    %p10 = scmp.ge.s32.totalorder %s9, 4
    %s19 = sphi 0, %s21
    %s22 = sphi 0, %s19
    %s23 = sphi 0, %s22
    %s39 = sphi 0, %s23
    %s43 = sphi 0, %s43
    %s45 = sphi 0, %s43
    %s46 = sphi 0, %s45
    %s60 = sphi 0, %s46
    %s64 = sphi 0, %s64
    %s66 = sphi 0, %s64
    %s67 = sphi 0, %s66
    %s81 = sphi 0, %s67
    %s87 = sphi 0, %s89
    %s90 = sphi 0, %s87
    %s91 = sphi 0, %s90
    %s107 = sphi 0, %s91
  $region4: #{tpu_custom_call.1} parent=0 // loop_header_branch
    %12 = sbr.rel (%p10) target = $region8
  $region5: #{tpu_custom_call.1} parent=0 // loop_body
    %s14 = ssub.s32 %s9, 1
    %s15 = ssub.s32 %s9, 2
    %s16 = sadd.s32 %s9, 1
    %s17 = ssub.s32 %s9, %s16
    %p18 = scmp.eq.s32.totalorder %s17, 0
    %s20 = sadd.s32 %s19, 1
    %s21 = scalar_select %p18, %s19, %s20
    %p24 = pneg %p18
    %p25 = scmp.eq.s32.totalorder %s9, 1
    %p26 = por %p24, %p25
    %p27 = scmp.ne.s32.totalorder %s19, %s22
    %p28 = scmp.eq.s32.totalorder %s9, 0
    %p29 = por %p27, %p28
    %p30 = scmp.ne.s32.totalorder %s19, %s22
    %p31 = scmp.eq.s32.totalorder %s14, 1
    %p32 = por %p30, %p31
    %p33 = scmp.ne.s32.totalorder %s22, %s23
    %p34 = scmp.eq.s32.totalorder %s14, 0
    %p35 = por %p33, %p34
    %p36 = scmp.ne.s32.totalorder %s22, %s23
    %p37 = scmp.eq.s32.totalorder %s15, 1
    %p38 = por %p36, %p37
    %p40 = scmp.ne.s32.totalorder %s23, %s39
    %p41 = scmp.eq.s32.totalorder %s15, 0
    %p42 = por %p40, %p41
    %s44 = sadd.s32 %s43, 1
    %p47 = scmp.eq.s32.totalorder %s9, 1
    %p48 = scmp.ne.s32.totalorder %s43, %s45
    %p49 = scmp.eq.s32.totalorder %s9, 0
    %p50 = por %p48, %p49
    %p51 = scmp.ne.s32.totalorder %s43, %s45
    %p52 = scmp.eq.s32.totalorder %s14, 1
    %p53 = por %p51, %p52
    %p54 = scmp.ne.s32.totalorder %s45, %s46
    %p55 = scmp.eq.s32.totalorder %s14, 0
    %p56 = por %p54, %p55
    %p57 = scmp.ne.s32.totalorder %s45, %s46
    %p58 = scmp.eq.s32.totalorder %s15, 1
    %p59 = por %p57, %p58
    %p61 = scmp.ne.s32.totalorder %s46, %s60
    %p62 = scmp.eq.s32.totalorder %s15, 0
    %p63 = por %p61, %p62
    %s65 = sadd.s32 %s64, 1
    %p68 = scmp.eq.s32.totalorder %s9, 1
    %p69 = scmp.ne.s32.totalorder %s64, %s66
    %p70 = scmp.eq.s32.totalorder %s9, 0
    %p71 = por %p69, %p70
    %p72 = scmp.ne.s32.totalorder %s64, %s66
    %p73 = scmp.eq.s32.totalorder %s14, 1
    %p74 = por %p72, %p73
    %p75 = scmp.ne.s32.totalorder %s66, %s67
    %p76 = scmp.eq.s32.totalorder %s14, 0
    %p77 = por %p75, %p76
    %p78 = scmp.ne.s32.totalorder %s66, %s67
    %p79 = scmp.eq.s32.totalorder %s15, 1
    %p80 = por %p78, %p79
    %p82 = scmp.ne.s32.totalorder %s67, %s81
    %p83 = scmp.eq.s32.totalorder %s15, 0
    %p84 = por %p82, %p83
    %s85 = ssub.s32 %s9, %s16
    %p86 = scmp.eq.s32.totalorder %s85, 0
    %s88 = sadd.s32 %s87, 1
    %s89 = scalar_select %p86, %s87, %s88
    %p92 = pneg %p86
    %p93 = scmp.eq.s32.totalorder %s9, 1
    %p94 = por %p92, %p93
    %p95 = scmp.ne.s32.totalorder %s87, %s90
    %p96 = scmp.eq.s32.totalorder %s9, 0
    %p97 = por %p95, %p96
    %p98 = scmp.ne.s32.totalorder %s87, %s90
    %p99 = scmp.eq.s32.totalorder %s14, 1
    %p100 = por %p98, %p99
    %p101 = scmp.ne.s32.totalorder %s90, %s91
    %p102 = scmp.eq.s32.totalorder %s14, 0
    %p103 = por %p101, %p102
    %p104 = scmp.ne.s32.totalorder %s90, %s91
    %p105 = scmp.eq.s32.totalorder %s15, 1
    %p106 = por %p104, %p105
    %p108 = scmp.ne.s32.totalorder %s91, %s107
    %p109 = scmp.eq.s32.totalorder %s15, 0
    %p110 = por %p108, %p109
    %p111 = scmp.le.s32.totalorder 1, %s9
    %p112 = scmp.lt.s32.totalorder %s9, 3
    %p113 = pnand %p111, %p112
    %p114 = pneg %p113
    // Predicated region
    $region9: #{tpu_custom_call.1} parent=5 // pred_check
      _
    $region10: #{tpu_custom_call.1} parent=5 // pred_check_branch
      %116 = sbr.rel (%p113) target = $region12
    $region11: #{tpu_custom_call.1} parent=5 // pred_region
      %s117 = ssub.s32 %s9, 1
      // Predicated region
      $region13: #{tpu_custom_call.1} parent=11 // pred_check
        %p118 = pneg %p56
      $region14: #{tpu_custom_call.1} parent=11 // pred_check_branch
        %120 = sbr.rel (%p118) target = $region16
      $region15: #{tpu_custom_call.1} parent=11 // pred_region
        _
      $region16: #{tpu_custom_call.1} parent=11 // pred_fallthru
        _
      // Predicated region
      $region17: #{tpu_custom_call.1} parent=11 // pred_check
        %p121 = pneg %p77
      $region18: #{tpu_custom_call.1} parent=11 // pred_check_branch
        %123 = sbr.rel (%p121) target = $region20
      $region19: #{tpu_custom_call.1} parent=11 // pred_region
        _
      $region20: #{tpu_custom_call.1} parent=11 // pred_fallthru
        _
    $region12: #{tpu_custom_call.1} parent=5 // pred_fallthru
      _
    %p124 = scmp.lt.s32.totalorder %s9, 2
    // Predicated region
    $region21: #{tpu_custom_call.1} parent=5 // pred_check
      %p125 = pneg %p124
    $region22: #{tpu_custom_call.1} parent=5 // pred_check_branch
      %127 = sbr.rel (%p125) target = $region24
    $region23: #{tpu_custom_call.1} parent=5 // pred_region
      // Predicated region
      $region25: #{tpu_custom_call.1} parent=23 // pred_check
        %p128 = pneg %p29
      $region26: #{tpu_custom_call.1} parent=23 // pred_check_branch
        %130 = sbr.rel (%p128) target = $region28
      $region27: #{tpu_custom_call.1} parent=23 // pred_region
        %p131 = scmp.lt.s32.totalorder %s9, 1
        %s132 = scalar_select %p131, %s9, 1
        %s133 = smul.addr %s132, 16
        %s134 = smul.addr %s133, 8
        %s135 = scalar_lea.vmem %s0, %s134
      $region28: #{tpu_custom_call.1} parent=23 // pred_fallthru
        _
    $region24: #{tpu_custom_call.1} parent=5 // pred_fallthru
      _
    %p136 = scmp.le.s32.totalorder 1, %s9
    %p137 = scmp.lt.s32.totalorder %s9, 3
    %p138 = pnand %p136, %p137
    %p139 = pneg %p138
    // Predicated region
    $region29: #{tpu_custom_call.1} parent=5 // pred_check
      _
    $region30: #{tpu_custom_call.1} parent=5 // pred_check_branch
      %141 = sbr.rel (%p138) target = $region32
    $region31: #{tpu_custom_call.1} parent=5 // pred_region
      %s142 = ssub.s32 %s9, 1
      %p143 = scmp.lt.s32.totalorder %s14, 1
      %s144 = scalar_select %p143, %s14, 1
      %s145 = smul.addr %s144, 16
      %s146 = smul.addr %s145, 8
      %s147 = scalar_lea.vmem %s0, %s146
      %p148 = pneg %p35
      %p149 = pneg %p32
      %p150 = pneg %p56
      %p151 = pneg %p53
      %p152 = pneg %p77
      %p153 = pneg %p74
      %p154 = pneg %p103
      %p155 = pneg %p100
      %p156 = scmp.lt.s32.totalorder %s14, 1
      %s157 = scalar_select %p156, %s14, 1
      %s158 = smul.addr %s157, 16
      %s159 = smul.addr %s158, 8
      %s160 = scalar_lea.vmem %s3, %s159
      %p161 = scmp.lt.s32.totalorder %s14, 1
      %s162 = scalar_select %p161, %s14, 1
      %s163 = smul.addr %s162, 16
      %s164 = smul.addr %s163, 8
      %s165 = scalar_lea.vmem %s0, %s164
      %p166 = scmp.lt.s32.totalorder %s14, 1
      %s167 = scalar_select %p166, %s14, 1
      %s168 = smul.addr %s167, 16
      %s169 = smul.addr %s168, 8
      %s170 = scalar_lea.vmem %s3, %s169
      %v171 = vld [vmem:[%s165] sm:$0xff]
      %v172 = vld [vmem:[%s165 + $0x8] sm:$0xff]
      %v173 = vld [vmem:[%s165 + $0x10] sm:$0xff]
      %v174 = vld [vmem:[%s165 + $0x18] sm:$0xff]
      %v175 = vld [vmem:[%s165 + $0x20] sm:$0xff]
      %v176 = vld [vmem:[%s165 + $0x28] sm:$0xff]
      %v177 = vld [vmem:[%s165 + $0x30] sm:$0xff]
      %v178 = vld [vmem:[%s165 + $0x38] sm:$0xff]
      %v179 = vld [vmem:[%s165 + $0x40] sm:$0xff]
      %v180 = vld [vmem:[%s165 + $0x48] sm:$0xff]
      %v181 = vld [vmem:[%s165 + $0x50] sm:$0xff]
      %v182 = vld [vmem:[%s165 + $0x58] sm:$0xff]
      %v183 = vld [vmem:[%s165 + $0x60] sm:$0xff]
      %v184 = vld [vmem:[%s165 + $0x68] sm:$0xff]
      %v185 = vld [vmem:[%s165 + $0x70] sm:$0xff]
      %v186 = vld [vmem:[%s165 + $0x78] sm:$0xff]
      %vm187 = vcmask 400384
      %v188 = vsel %vm187, %v171, 0.0
      %189 = vadd.xlane.f32.xlu0 %v188
      %v190 = vpop.xlane.xlu0 %189
      %v191 = vsel %vm187, %v172, 0.0
      %192 = vadd.xlane.f32.xlu0 %v191
      %v193 = vpop.xlane.xlu0 %192
      %v194 = vsel %vm187, %v173, 0.0
      %195 = vadd.xlane.f32.xlu0 %v194
      %v196 = vpop.xlane.xlu0 %195
      %v197 = vsel %vm187, %v174, 0.0
      %198 = vadd.xlane.f32.xlu0 %v197
      %v199 = vpop.xlane.xlu0 %198
      %v200 = vsel %vm187, %v175, 0.0
      %201 = vadd.xlane.f32.xlu0 %v200
      %v202 = vpop.xlane.xlu0 %201
      %v203 = vsel %vm187, %v176, 0.0
      %204 = vadd.xlane.f32.xlu0 %v203
      %v205 = vpop.xlane.xlu0 %204
      %v206 = vsel %vm187, %v177, 0.0
      %207 = vadd.xlane.f32.xlu0 %v206
      %v208 = vpop.xlane.xlu0 %207
      %v209 = vsel %vm187, %v178, 0.0
      %210 = vadd.xlane.f32.xlu0 %v209
      %v211 = vpop.xlane.xlu0 %210
      %v212 = vsel %vm187, %v179, 0.0
      %213 = vadd.xlane.f32.xlu0 %v212
      %v214 = vpop.xlane.xlu0 %213
      %v215 = vsel %vm187, %v180, 0.0
      %216 = vadd.xlane.f32.xlu0 %v215
      %v217 = vpop.xlane.xlu0 %216
      %v218 = vsel %vm187, %v181, 0.0
      %219 = vadd.xlane.f32.xlu0 %v218
      %v220 = vpop.xlane.xlu0 %219
      %v221 = vsel %vm187, %v182, 0.0
      %222 = vadd.xlane.f32.xlu0 %v221
      %v223 = vpop.xlane.xlu0 %222
      %v224 = vsel %vm187, %v183, 0.0
      %225 = vadd.xlane.f32.xlu0 %v224
      %v226 = vpop.xlane.xlu0 %225
      %v227 = vsel %vm187, %v184, 0.0
      %228 = vadd.xlane.f32.xlu0 %v227
      %v229 = vpop.xlane.xlu0 %228
      %v230 = vsel %vm187, %v185, 0.0
      %231 = vadd.xlane.f32.xlu0 %v230
      %v232 = vpop.xlane.xlu0 %231
      %v233 = vsel %vm187, %v186, 0.0
      %234 = vadd.xlane.f32.xlu0 %v233
      %v235 = vpop.xlane.xlu0 %234
      %v236 = vmul.f32 %v190, 0.020408163
      %v237 = vmul.f32 %v193, 0.020408163
      %v238 = vmul.f32 %v196, 0.020408163
      %v239 = vmul.f32 %v199, 0.020408163
      %v240 = vmul.f32 %v202, 0.020408163
      %v241 = vmul.f32 %v205, 0.020408163
      %v242 = vmul.f32 %v208, 0.020408163
      %v243 = vmul.f32 %v211, 0.020408163
      %v244 = vmul.f32 %v214, 0.020408163
      %v245 = vmul.f32 %v217, 0.020408163
      %v246 = vmul.f32 %v220, 0.020408163
      %v247 = vmul.f32 %v223, 0.020408163
      %v248 = vmul.f32 %v226, 0.020408163
      %v249 = vmul.f32 %v229, 0.020408163
      %v250 = vmul.f32 %v232, 0.020408163
      %v251 = vmul.f32 %v235, 0.020408163
      %v252 = vld [vmem:[%s1] sm:$0xff]
      %v253 = vld [vmem:[%s1 + $0x8] sm:$0xff]
      %v254 = vld [vmem:[%s1 + $0x10] sm:$0xff]
      %v255 = vld [vmem:[%s1 + $0x18] sm:$0xff]
      %v256 = vld [vmem:[%s1 + $0x20] sm:$0xff]
      %v257 = vld [vmem:[%s1 + $0x28] sm:$0xff]
      %v258 = vld [vmem:[%s1 + $0x30] sm:$0xff]
      %v259 = vld [vmem:[%s1 + $0x38] sm:$0xff]
      %v260 = vld [vmem:[%s1 + $0x40] sm:$0xff]
      %v261 = vld [vmem:[%s1 + $0x48] sm:$0xff]
      %v262 = vld [vmem:[%s1 + $0x50] sm:$0xff]
      %v263 = vld [vmem:[%s1 + $0x58] sm:$0xff]
      %v264 = vld [vmem:[%s1 + $0x60] sm:$0xff]
      %v265 = vld [vmem:[%s1 + $0x68] sm:$0xff]
      %v266 = vld [vmem:[%s1 + $0x70] sm:$0xff]
      %v267 = vld [vmem:[%s1 + $0x78] sm:$0xff]
      %v284 = vlaneseq
      %v285 = vand.u32 %v284, 127
      %v286 = vlaneseq
      %v287 = vshrl.u32 %v286, 7
      %v288 = vsub.s32 %v285, %v287
      %v289 = vrot.slane %v236, %v288
      %v290 = vadd.s32 %v285, 4294967288
      %v291 = vlaneseq
      %v292 = vshrl.u32 %v291, 7
      %v293 = vsub.s32 %v290, %v292
      %v294 = vrot.slane %v237, %v293
      %vm295 = vcmask 130112
      %v296 = vsel %vm295, %v294, %v289
      %v297 = vadd.s32 %v285, 4294967280
      %v298 = vlaneseq
      %v299 = vshrl.u32 %v298, 7
      %v300 = vsub.s32 %v297, %v299
      %v301 = vrot.slane %v238, %v300
      %vm302 = vcmask 195712
      %v303 = vsel %vm302, %v301, %v296
      %v304 = vadd.s32 %v285, 4294967272
      %v305 = vlaneseq
      %v306 = vshrl.u32 %v305, 7
      %v307 = vsub.s32 %v304, %v306
      %v308 = vrot.slane %v239, %v307
      %vm309 = vcmask 261312
      %v310 = vsel %vm309, %v308, %v303
      %v311 = vadd.s32 %v285, 4294967264
      %v312 = vlaneseq
      %v313 = vshrl.u32 %v312, 7
      %v314 = vsub.s32 %v311, %v313
      %v315 = vrot.slane %v240, %v314
      %vm316 = vcmask 326912
      %v317 = vsel %vm316, %v315, %v310
      %v318 = vadd.s32 %v285, 4294967256
      %v319 = vlaneseq
      %v320 = vshrl.u32 %v319, 7
      %v321 = vsub.s32 %v318, %v320
      %v322 = vrot.slane %v241, %v321
      %vm323 = vcmask 392512
      %v324 = vsel %vm323, %v322, %v317
      %v325 = vadd.s32 %v285, 4294967248
      %v326 = vlaneseq
      %v327 = vshrl.u32 %v326, 7
      %v328 = vsub.s32 %v325, %v327
      %v329 = vrot.slane %v242, %v328
      %vm330 = vcmask 458112
      %v331 = vsel %vm330, %v329, %v324
      %v332 = vadd.s32 %v285, 4294967240
      %v333 = vlaneseq
      %v334 = vshrl.u32 %v333, 7
      %v335 = vsub.s32 %v332, %v334
      %v336 = vrot.slane %v243, %v335
      %vm337 = vcmask 523712
      %v338 = vsel %vm337, %v336, %v331
      %v339 = vadd.s32 %v285, 4294967232
      %v340 = vlaneseq
      %v341 = vshrl.u32 %v340, 7
      %v342 = vsub.s32 %v339, %v341
      %v343 = vrot.slane %v244, %v342
      %vm344 = vcmask 589312
      %v345 = vsel %vm344, %v343, %v338
      %v346 = vadd.s32 %v285, 4294967224
      %v347 = vlaneseq
      %v348 = vshrl.u32 %v347, 7
      %v349 = vsub.s32 %v346, %v348
      %v350 = vrot.slane %v245, %v349
      %vm351 = vcmask 654912
      %v352 = vsel %vm351, %v350, %v345
      %v353 = vadd.s32 %v285, 4294967216
      %v354 = vlaneseq
      %v355 = vshrl.u32 %v354, 7
      %v356 = vsub.s32 %v353, %v355
      %v357 = vrot.slane %v246, %v356
      %vm358 = vcmask 720512
      %v359 = vsel %vm358, %v357, %v352
      %v360 = vadd.s32 %v285, 4294967208
      %v361 = vlaneseq
      %v362 = vshrl.u32 %v361, 7
      %v363 = vsub.s32 %v360, %v362
      %v364 = vrot.slane %v247, %v363
      %vm365 = vcmask 786112
      %v366 = vsel %vm365, %v364, %v359
      %v367 = vadd.s32 %v285, 4294967200
      %v368 = vlaneseq
      %v369 = vshrl.u32 %v368, 7
      %v370 = vsub.s32 %v367, %v369
      %v371 = vrot.slane %v248, %v370
      %vm372 = vcmask 851712
      %v373 = vsel %vm372, %v371, %v366
      %v374 = vadd.s32 %v285, 4294967192
      %v375 = vlaneseq
      %v376 = vshrl.u32 %v375, 7
      %v377 = vsub.s32 %v374, %v376
      %v378 = vrot.slane %v249, %v377
      %vm379 = vcmask 917312
      %v380 = vsel %vm379, %v378, %v373
      %v381 = vadd.s32 %v285, 4294967184
      %v382 = vlaneseq
      %v383 = vshrl.u32 %v382, 7
      %v384 = vsub.s32 %v381, %v383
      %v385 = vrot.slane %v250, %v384
      %vm386 = vcmask 982912
      %v387 = vsel %vm386, %v385, %v380
      %v388 = vadd.s32 %v285, 4294967176
      %v389 = vlaneseq
      %v390 = vshrl.u32 %v389, 7
      %v391 = vsub.s32 %v388, %v390
      %v392 = vrot.slane %v251, %v391
      %vm393 = vcmask 1048512
      %v394 = vsel %vm393, %v392, %v387
      %396 = vmatprep.subr.mxu0 0.0
      %397 = vmatpush1.msra.mxu0 %v267
      %398 = vmatprep.subr.mxu0 0.0
      %399 = vmatpush1.msra.mxu0 %v266
      %400 = vmatprep.subr.mxu0 0.0
      %401 = vmatpush1.msra.mxu0 %v265
      %402 = vmatprep.subr.mxu0 0.0
      %403 = vmatpush1.msra.mxu0 %v264
      %404 = vmatprep.subr.mxu0 0.0
      %405 = vmatpush1.msra.mxu0 %v263
      %406 = vmatprep.subr.mxu0 0.0
      %407 = vmatpush1.msra.mxu0 %v262
      %408 = vmatprep.subr.mxu0 0.0
      %409 = vmatpush1.msra.mxu0 %v261
      %410 = vmatprep.subr.mxu0 0.0
      %411 = vmatpush1.msra.mxu0 %v260
      %412 = vmatprep.subr.mxu0 0.0
      %413 = vmatpush1.msra.mxu0 %v259
      %414 = vmatprep.subr.mxu0 0.0
      %415 = vmatpush1.msra.mxu0 %v258
      %416 = vmatprep.subr.mxu0 0.0
      %417 = vmatpush1.msra.mxu0 %v257
      %418 = vmatprep.subr.mxu0 0.0
      %419 = vmatpush1.msra.mxu0 %v256
      %420 = vmatprep.subr.mxu0 0.0
      %421 = vmatpush1.msra.mxu0 %v255
      %422 = vmatprep.subr.mxu0 0.0
      %423 = vmatpush1.msra.mxu0 %v254
      %424 = vmatprep.subr.mxu0 0.0
      %425 = vmatpush1.msra.mxu0 %v253
      %426 = vmatprep.subr.mxu0 0.0
      %427 = vmatpush1.msra.mxu0 %v252
      %428 = vmatprep.subr.mxu0 0.0
      %429 = vmatpush2.msra.mxu0 0.0
      %430 = vmatprep.subr.mxu0 0.0
      %431 = vmatpush2.msra.mxu0 0.0
      %432 = vmatprep.subr.mxu0 0.0
      %433 = vmatpush2.msra.mxu0 0.0
      %434 = vmatprep.subr.mxu0 0.0
      %435 = vmatpush2.msra.mxu0 0.0
      %436 = vmatprep.subr.mxu0 0.0
      %437 = vmatpush2.msra.mxu0 0.0
      %438 = vmatprep.subr.mxu0 0.0
      %439 = vmatpush2.msra.mxu0 0.0
      %440 = vmatprep.subr.mxu0 0.0
      %441 = vmatpush2.msra.mxu0 0.0
      %442 = vmatprep.subr.mxu0 0.0
      %443 = vmatpush2.msra.mxu0 0.0
      %444 = vmatprep.subr.mxu0 0.0
      %445 = vmatpush2.msra.mxu0 0.0
      %446 = vmatprep.subr.mxu0 0.0
      %447 = vmatpush2.msra.mxu0 0.0
      %448 = vmatprep.subr.mxu0 0.0
      %449 = vmatpush2.msra.mxu0 0.0
      %450 = vmatprep.subr.mxu0 0.0
      %451 = vmatpush2.msra.mxu0 0.0
      %452 = vmatprep.subr.mxu0 0.0
      %453 = vmatpush2.msra.mxu0 0.0
      %454 = vmatprep.subr.mxu0 0.0
      %455 = vmatpush2.msra.mxu0 0.0
      %456 = vmatprep.subr.mxu0 0.0
      %457 = vmatpush2.msra.mxu0 0.0
      %458 = vmatprep.subr.mxu0 0.0
      %459 = vmatpush2.msra.mxu0 0.0
      %460 = vmatprep.mubr.f32.mxu0 0.0
      %461 = vmatmul.mubr.f32.gmra.mxu0 %v394
      %v462 = vpop.f32.mrf.mxu0
      %v463 = vadd.f32 0.0, %v462
      %v464 = vpop.f32.mrf.mxu0
      %465 = vdwg.mxu0
      %v466 = vmax.f32 %v463, 0.0
      %v467 = vld [vmem:[%s2] sm:$0xff]
      %vm468 = vcmask 64512
      %v470 = vsel %vm468, %v466, 0
      %472 = vmatprep.subr.mxu0 0.0
      %473 = vmatpush1.msra.mxu0 0.0
      %474 = vmatprep.subr.mxu0 0.0
      %475 = vmatpush1.msra.mxu0 0.0
      %476 = vmatprep.subr.mxu0 0.0
      %477 = vmatpush1.msra.mxu0 0.0
      %478 = vmatprep.subr.mxu0 0.0
      %479 = vmatpush1.msra.mxu0 0.0
      %480 = vmatprep.subr.mxu0 0.0
      %481 = vmatpush1.msra.mxu0 0.0
      %482 = vmatprep.subr.mxu0 0.0
      %483 = vmatpush1.msra.mxu0 0.0
      %484 = vmatprep.subr.mxu0 0.0
      %485 = vmatpush1.msra.mxu0 0.0
      %486 = vmatprep.subr.mxu0 0.0
      %487 = vmatpush1.msra.mxu0 0.0
      %488 = vmatprep.subr.mxu0 0.0
      %489 = vmatpush1.msra.mxu0 0.0
      %490 = vmatprep.subr.mxu0 0.0
      %491 = vmatpush1.msra.mxu0 0.0
      %492 = vmatprep.subr.mxu0 0.0
      %493 = vmatpush1.msra.mxu0 0.0
      %494 = vmatprep.subr.mxu0 0.0
      %495 = vmatpush1.msra.mxu0 0.0
      %496 = vmatprep.subr.mxu0 0.0
      %497 = vmatpush1.msra.mxu0 0.0
      %498 = vmatprep.subr.mxu0 0.0
      %499 = vmatpush1.msra.mxu0 0.0
      %500 = vmatprep.subr.mxu0 0.0
      %501 = vmatpush1.msra.mxu0 0.0
      %502 = vmatprep.subr.mxu0 0.0
      %503 = vmatpush1.msra.mxu0 %v467
      %504 = vmatprep.subr.mxu0 0.0
      %505 = vmatpush2.msra.mxu0 0.0
      %506 = vmatprep.subr.mxu0 0.0
      %507 = vmatpush2.msra.mxu0 0.0
      %508 = vmatprep.subr.mxu0 0.0
      %509 = vmatpush2.msra.mxu0 0.0
      %510 = vmatprep.subr.mxu0 0.0
      %511 = vmatpush2.msra.mxu0 0.0
      %512 = vmatprep.subr.mxu0 0.0
      %513 = vmatpush2.msra.mxu0 0.0
      %514 = vmatprep.subr.mxu0 0.0
      %515 = vmatpush2.msra.mxu0 0.0
      %516 = vmatprep.subr.mxu0 0.0
      %517 = vmatpush2.msra.mxu0 0.0
      %518 = vmatprep.subr.mxu0 0.0
      %519 = vmatpush2.msra.mxu0 0.0
      %520 = vmatprep.subr.mxu0 0.0
      %521 = vmatpush2.msra.mxu0 0.0
      %522 = vmatprep.subr.mxu0 0.0
      %523 = vmatpush2.msra.mxu0 0.0
      %524 = vmatprep.subr.mxu0 0.0
      %525 = vmatpush2.msra.mxu0 0.0
      %526 = vmatprep.subr.mxu0 0.0
      %527 = vmatpush2.msra.mxu0 0.0
      %528 = vmatprep.subr.mxu0 0.0
      %529 = vmatpush2.msra.mxu0 0.0
      %530 = vmatprep.subr.mxu0 0.0
      %531 = vmatpush2.msra.mxu0 0.0
      %532 = vmatprep.subr.mxu0 0.0
      %533 = vmatpush2.msra.mxu0 0.0
      %534 = vmatprep.subr.mxu0 0.0
      %535 = vmatpush2.msra.mxu0 0.0
      %536 = vmatprep.mubr.f32.mxu0 0.0
      %537 = vmatmul.mubr.f32.gmra.mxu0 %v470
      %v538 = vpop.f32.mrf.mxu0
      %v539 = vadd.f32 0.0, %v538
      %v540 = vpop.f32.mrf.mxu0
      %541 = vdwg.mxu0
      %v542 = vxor.u32 %v539, 2147483648
      %v543 = vmul.f32 %v542, 1.442695
      %v544 = vpow.pop %v543
      %v545 = vadd.f32 %v544, 1.0
      %v546 = vrcp.pop %v545
      %v547 = vmul.f32 1.0, %v546
      %v548 = vlaneseq
      %v549 = vshrl.u32 %v548, 7
      %v550 = vsub.s32 0, %v549
      %v551 = vrot.slane %v547, %v550
      %553 = vbcast.lane.b32.xlu0 %v551, 256
      %v554 = vpop.permute.xlu0 %553
      %s556 = sor.u32 256, 8
      %557 = vbcast.lane.b32.xlu0 %v551, %s556
      %v558 = vpop.permute.xlu0 %557
      %s560 = sor.u32 256, 16
      %561 = vbcast.lane.b32.xlu0 %v551, %s560
      %v562 = vpop.permute.xlu0 %561
      %s564 = sor.u32 256, 24
      %565 = vbcast.lane.b32.xlu0 %v551, %s564
      %v566 = vpop.permute.xlu0 %565
      %s568 = sor.u32 256, 32
      %569 = vbcast.lane.b32.xlu0 %v551, %s568
      %v570 = vpop.permute.xlu0 %569
      %s572 = sor.u32 256, 40
      %573 = vbcast.lane.b32.xlu0 %v551, %s572
      %v574 = vpop.permute.xlu0 %573
      %s576 = sor.u32 256, 48
      %577 = vbcast.lane.b32.xlu0 %v551, %s576
      %v578 = vpop.permute.xlu0 %577
      %s580 = sor.u32 256, 56
      %581 = vbcast.lane.b32.xlu0 %v551, %s580
      %v582 = vpop.permute.xlu0 %581
      %s584 = sor.u32 256, 64
      %585 = vbcast.lane.b32.xlu0 %v551, %s584
      %v586 = vpop.permute.xlu0 %585
      %s588 = sor.u32 256, 72
      %589 = vbcast.lane.b32.xlu0 %v551, %s588
      %v590 = vpop.permute.xlu0 %589
      %s592 = sor.u32 256, 80
      %593 = vbcast.lane.b32.xlu0 %v551, %s592
      %v594 = vpop.permute.xlu0 %593
      %s596 = sor.u32 256, 88
      %597 = vbcast.lane.b32.xlu0 %v551, %s596
      %v598 = vpop.permute.xlu0 %597
      %s600 = sor.u32 256, 96
      %601 = vbcast.lane.b32.xlu0 %v551, %s600
      %v602 = vpop.permute.xlu0 %601
      %s604 = sor.u32 256, 104
      %605 = vbcast.lane.b32.xlu0 %v551, %s604
      %v606 = vpop.permute.xlu0 %605
      %s608 = sor.u32 256, 112
      %609 = vbcast.lane.b32.xlu0 %v551, %s608
      %v610 = vpop.permute.xlu0 %609
      %s612 = sor.u32 256, 120
      %613 = vbcast.lane.b32.xlu0 %v551, %s612
      %v614 = vpop.permute.xlu0 %613
      %v615 = vmul.f32 %v171, %v554
      %v616 = vmul.f32 %v172, %v558
      %v617 = vmul.f32 %v173, %v562
      %v618 = vmul.f32 %v174, %v566
      %v619 = vmul.f32 %v175, %v570
      %v620 = vmul.f32 %v176, %v574
      %v621 = vmul.f32 %v177, %v578
      %v622 = vmul.f32 %v178, %v582
      %v623 = vmul.f32 %v179, %v586
      %v624 = vmul.f32 %v180, %v590
      %v625 = vmul.f32 %v181, %v594
      %v626 = vmul.f32 %v182, %v598
      %v627 = vmul.f32 %v183, %v602
      %v628 = vmul.f32 %v184, %v606
      %v629 = vmul.f32 %v185, %v610
      %v630 = vmul.f32 %v186, %v614
      %631 = vst.msk [vmem:[%s170] sm:$0xff] %vm187, %v615
      %632 = vst.msk [vmem:[%s170 + $0x8] sm:$0xff] %vm187, %v616
      %633 = vst.msk [vmem:[%s170 + $0x10] sm:$0xff] %vm187, %v617
      %634 = vst.msk [vmem:[%s170 + $0x18] sm:$0xff] %vm187, %v618
      %635 = vst.msk [vmem:[%s170 + $0x20] sm:$0xff] %vm187, %v619
      %636 = vst.msk [vmem:[%s170 + $0x28] sm:$0xff] %vm187, %v620
      %637 = vst.msk [vmem:[%s170 + $0x30] sm:$0xff] %vm187, %v621
      %638 = vst.msk [vmem:[%s170 + $0x38] sm:$0xff] %vm187, %v622
      %639 = vst.msk [vmem:[%s170 + $0x40] sm:$0xff] %vm187, %v623
      %640 = vst.msk [vmem:[%s170 + $0x48] sm:$0xff] %vm187, %v624
      %641 = vst.msk [vmem:[%s170 + $0x50] sm:$0xff] %vm187, %v625
      %642 = vst.msk [vmem:[%s170 + $0x58] sm:$0xff] %vm187, %v626
      %643 = vst.msk [vmem:[%s170 + $0x60] sm:$0xff] %vm187, %v627
      %644 = vst.msk [vmem:[%s170 + $0x68] sm:$0xff] %vm187, %v628
      %645 = vst.msk [vmem:[%s170 + $0x70] sm:$0xff] %vm187, %v629
      %646 = vst.msk [vmem:[%s170 + $0x78] sm:$0xff] %vm187, %v630
      %p647 = scmp.lt.s32.totalorder %s14, 1
      %s648 = scalar_select %p647, %s14, 1
      %s649 = smul.addr %s648, 16
      %s650 = smul.addr %s649, 8
      %s651 = scalar_lea.vmem %s3, %s650
      // Predicated region
      $region33: #{tpu_custom_call.1} parent=31 // pred_check
        %p652 = pneg %p100
      $region34: #{tpu_custom_call.1} parent=31 // pred_check_branch
        %654 = sbr.rel (%p652) target = $region36
      $region35: #{tpu_custom_call.1} parent=31 // pred_region
        _
      $region36: #{tpu_custom_call.1} parent=31 // pred_fallthru
        _
    $region32: #{tpu_custom_call.1} parent=5 // pred_fallthru
      _
    %p655 = scmp.le.s32.totalorder 2, %s9
    // Predicated region
    $region37: #{tpu_custom_call.1} parent=5 // pred_check
      %p656 = pneg %p655
    $region38: #{tpu_custom_call.1} parent=5 // pred_check_branch
      %658 = sbr.rel (%p656) target = $region40
    $region39: #{tpu_custom_call.1} parent=5 // pred_region
      %s659 = ssub.s32 %s9, 2
      // Predicated region
      $region41: #{tpu_custom_call.1} parent=39 // pred_check
        %p660 = pneg %p106
      $region42: #{tpu_custom_call.1} parent=39 // pred_check_branch
        %662 = sbr.rel (%p660) target = $region44
      $region43: #{tpu_custom_call.1} parent=39 // pred_region
        %p663 = scmp.lt.s32.totalorder %s15, 1
        %s664 = scalar_select %p663, %s15, 1
        %s665 = smul.addr %s664, 16
        %s666 = smul.addr %s665, 8
        %s667 = scalar_lea.vmem %s3, %s666
      $region44: #{tpu_custom_call.1} parent=39 // pred_fallthru
        _
    $region40: #{tpu_custom_call.1} parent=5 // pred_fallthru
      _
  $region6: #{tpu_custom_call.1} parent=0 // loop_footer
    %s13 = sadd.s32 1, %s9
  $region7: #{tpu_custom_call.1} parent=0 // loop_footer_branch
    %8 = sbr.rel target = $region3
  $region8: #{tpu_custom_call.1} parent=0 // loop_exit
    _

</llo_original>
